<compile_context>
chip_gen: v7x
topology: tpu7x:2x2x1
jax: 0.10.0
libtpu: 0.0.40
codegen_flags: <defaults>
</compile_context>

<pallas_src>
import jax
import jax.numpy as jnp
from jax.experimental import pallas as pl
from jax.experimental.pallas import tpu as pltpu


def graphnets_kernel(x_ref, w1_ref, b1_ref, w2_ref, b2n_ref,
                     w3_ref, b3_ref, w4_ref, b4_ref, out_ref):
    bt, n, in_dim = x_ref.shape
    hid = w2_ref.shape[1]

    # One EdgeModel row per distinct node (node_i == node_j collapses the
    # n*n edge enumeration to n rows per sample).
    x = x_ref[...].reshape(bt * n, in_dim)

    # EdgeModel first layer + ReLU ([x, x] concat already folded into w1).
    h = jnp.dot(x, w1_ref[...], preferred_element_type=jnp.float32) + b1_ref[...]
    h = jnp.maximum(h, 0.0)                                           # (bt*n, hid)

    # Aggregate BEFORE the second (linear) EdgeModel layer:
    #   sum_k (h_k @ w2 + b2) == (sum_k h_k) @ w2 + n*b2
    # -> second edge matmul shrinks from n rows/sample to 1 row/sample.
    h_sum = h.reshape(bt, n, hid).sum(axis=1)                         # (bt, hid)
    agg = jnp.dot(h_sum.astype(w2_ref.dtype), w2_ref[...],
                  preferred_element_type=jnp.float32) + b2n_ref[...]  # (bt, hid)

    # NodeModel: Linear -> ReLU -> Linear, one row per sample.
    g = jnp.dot(agg.astype(w3_ref.dtype), w3_ref[...],
                preferred_element_type=jnp.float32) + b3_ref[...]
    g = jnp.maximum(g, 0.0)
    node = jnp.dot(g.astype(w4_ref.dtype), w4_ref[...],
                   preferred_element_type=jnp.float32) + b4_ref[...]  # (bt, hid)

    # All n node rows of a sample are identical; emit lane-dense (bt, n*hid)
    # so the store is an unmasked full-lane vst.
    out_ref[...] = jnp.tile(node, (1, n)).astype(out_ref.dtype)


def _pick_b_tile(bs, n, max_rows=4096, fill_rows=256):
    """Batch-tile: divisor of bs, sublane-friendly, MXU-filling when possible."""
    divisors = [d for d in range(1, bs + 1) if bs % d == 0]
    cands = [d for d in divisors if (d == bs or d % 8 == 0) and d * n <= max_rows]
    if not cands:
        return bs
    # Prefer >= 2 grid steps (v7x megacore) while keeping B_TILE*n >= fill_rows.
    multi = [d for d in cands if d * n >= fill_rows and bs // d >= 2]
    return min(multi) if multi else max(cands)


def graphnets_forward(x, params, *, compute_dtype=jnp.float32):
    """x: (bs, 2*n_players, in_dim) f32 -> (bs, 2*n_players, hid) f32."""
    bs, n, in_dim = x.shape
    hid = params["w2"].shape[1]

    # Fold the lane-dim concat [x, x] into the first weight (exact algebra).
    w1_fold = params["w1"][:in_dim, :] + params["w1"][in_dim:, :]
    # Pre-scale the second edge bias by n (sum over n identical bias adds).
    b2n = params["b2"] * jnp.float32(n)

    b_tile = _pick_b_tile(bs, n)
    grid = (bs // b_tile,)

    cd = compute_dtype
    xc = x.astype(cd)
    w1c, w2c = w1_fold.astype(cd), params["w2"].astype(cd)
    w3c, w4c = params["w3"].astype(cd), params["w4"].astype(cd)
    b1, b3, b4 = params["b1"], params["b3"], params["b4"]

    def full_spec(arr):
        nd = arr.ndim
        return pl.BlockSpec(arr.shape, lambda b, _nd=nd: (0,) * _nd)

    out_flat = pl.pallas_call(
        graphnets_kernel,
        out_shape=jax.ShapeDtypeStruct((bs, n * hid), jnp.float32),
        grid=grid,
        in_specs=[
            pl.BlockSpec((b_tile, n, in_dim), lambda b: (b, 0, 0)),
            full_spec(w1c), full_spec(b1),
            full_spec(w2c), full_spec(b2n),
            full_spec(w3c), full_spec(b3),
            full_spec(w4c), full_spec(b4),
        ],
        out_specs=pl.BlockSpec((b_tile, n * hid), lambda b: (b, 0)),
        compiler_params=pltpu.CompilerParams(
            dimension_semantics=("parallel",)),
    )(xc, w1c, b1, w2c, b2n, w3c, b3, w4c, b4)

    return out_flat.reshape(bs, n, hid)


def make_params(key, in_dim, hid):
    """Deterministic synthetic parameters (PyTorch-Linear-like uniform init).

    Weights are stored (in_features, out_features), i.e. already transposed
    relative to nn.Linear, so forward is `x @ W + b`.
    """
    ks = jax.random.split(key, 8)

    def lin(kw, kb, fan_in, fan_out):
        bound = 1.0 / jnp.sqrt(fan_in)
        w = jax.random.uniform(kw, (fan_in, fan_out), jnp.float32, -bound, bound)
        b = jax.random.uniform(kb, (1, fan_out), jnp.float32, -bound, bound)
        return w, b

    w1, b1 = lin(ks[0], ks[1], 2 * in_dim, hid)   # EdgeModel.mlp1
    w2, b2 = lin(ks[2], ks[3], hid, hid)          # EdgeModel.mlp2
    w3, b3 = lin(ks[4], ks[5], hid, hid)          # NodeModel.mlp1
    w4, b4 = lin(ks[6], ks[7], hid, hid)          # NodeModel.mlp2
    return dict(w1=w1, b1=b1, w2=w2, b2=b2, w3=w3, b3=b3, w4=w4, b4=b4)


def reference_forward(x, p, n_players):
    """Literal pure-JAX transcription of the PyTorch forward, for verification
    (keeps the full n*n edge enumeration and strided aggregation)."""
    n = n_players * 2
    node_i = jnp.repeat(x, n, axis=1)                      # repeat_interleave dim=1
    edge_feats = jnp.concatenate([node_i, node_i], axis=2)
    h = jnp.maximum(edge_feats @ p["w1"] + p["b1"][0], 0.0)
    edge_out = h @ p["w2"] + p["b2"][0]
    edge_agg = jnp.stack(
        [edge_out[:, i::n, :].sum(axis=1) for i in range(n)], axis=1)
    g = jnp.maximum(edge_agg @ p["w3"] + p["b3"][0], 0.0)
    return g @ p["w4"] + p["b4"][0]


if __name__ == "__main__":
    n_players = 4          # -> 8 nodes per sample
    in_dim = 16
    hid = 32
    bs = 2

    key = jax.random.PRNGKey(0)
    kx, kp = jax.random.split(key)
    x = jax.random.normal(kx, (bs, n_players * 2, in_dim), dtype=jnp.float32)
    params = make_params(kp, in_dim, hid)

    ref = reference_forward(x, params, n_players)

    # f32 path: must match the PyTorch-faithful reference tightly.
    out = jax.block_until_ready(graphnets_forward(x, params))
    assert out.shape == (bs, n_players * 2, hid)
    assert jnp.allclose(out, ref, atol=1e-4, rtol=1e-4), "f32 mismatch vs reference"

    # bf16-operand path (MXU-friendly on v6e/v7x): f32 accumulate, loose check.
    out_bf16 = jax.block_until_ready(
        graphnets_forward(x, params, compute_dtype=jnp.bfloat16))
    assert jnp.allclose(out_bf16, ref, atol=1e-1, rtol=1e-1), "bf16 mismatch vs reference"

    print("KERNEL_OK")
</pallas_src>

<mosaic_0001>
module attributes {stable_mosaic.version = 11 : i64} {
  func.func @graphnets_kernel(%arg0: i32, %arg1: memref<2x8x16xf32, #tpu.memory_space<vmem>>, %arg2: memref<16x32xf32, #tpu.memory_space<vmem>>, %arg3: memref<1x32xf32, #tpu.memory_space<vmem>>, %arg4: memref<32x32xf32, #tpu.memory_space<vmem>>, %arg5: memref<1x32xf32, #tpu.memory_space<vmem>>, %arg6: memref<32x32xf32, #tpu.memory_space<vmem>>, %arg7: memref<1x32xf32, #tpu.memory_space<vmem>>, %arg8: memref<32x32xf32, #tpu.memory_space<vmem>>, %arg9: memref<1x32xf32, #tpu.memory_space<vmem>>, %arg10: memref<2x256xf32, #tpu.memory_space<vmem>>) attributes {dimension_semantics = [#tpu.dimension_semantics<parallel>], iteration_bounds = array<i64: 1>, scalar_prefetch = 0 : i64, scratch_operands = 0 : i64, tpu.core_type = #tpu.core_type<tc>, window_params = [{transform_indices = @transform_0, window_bounds = array<i64: 2, 8, 16>}, {pipeline_mode = #tpu.pipeline_mode<synchronous>, transform_indices = @transform_1, window_bounds = array<i64: 16, 32>}, {pipeline_mode = #tpu.pipeline_mode<synchronous>, transform_indices = @transform_2, window_bounds = array<i64: 1, 32>}, {pipeline_mode = #tpu.pipeline_mode<synchronous>, transform_indices = @transform_3, window_bounds = array<i64: 32, 32>}, {pipeline_mode = #tpu.pipeline_mode<synchronous>, transform_indices = @transform_4, window_bounds = array<i64: 1, 32>}, {pipeline_mode = #tpu.pipeline_mode<synchronous>, transform_indices = @transform_5, window_bounds = array<i64: 32, 32>}, {pipeline_mode = #tpu.pipeline_mode<synchronous>, transform_indices = @transform_6, window_bounds = array<i64: 1, 32>}, {pipeline_mode = #tpu.pipeline_mode<synchronous>, transform_indices = @transform_7, window_bounds = array<i64: 32, 32>}, {pipeline_mode = #tpu.pipeline_mode<synchronous>, transform_indices = @transform_8, window_bounds = array<i64: 1, 32>}, {transform_indices = @transform_9, window_bounds = array<i64: 2, 256>}]} {
    %c0 = arith.constant 0 : index
    %c0_0 = arith.constant 0 : index
    %c0_1 = arith.constant 0 : index
    %0 = vector.load %arg1[%c0, %c0_0, %c0_1] : memref<2x8x16xf32, #tpu.memory_space<vmem>>, vector<2x8x16xf32>
    %1 = vector.shape_cast %0 : vector<2x8x16xf32> to vector<16x16xf32>
    %c0_2 = arith.constant 0 : index
    %c0_3 = arith.constant 0 : index
    %2 = vector.load %arg2[%c0_2, %c0_3] : memref<16x32xf32, #tpu.memory_space<vmem>>, vector<16x32xf32>
    %cst = arith.constant dense<0.000000e+00> : vector<16x32xf32>
    %3 = tpu.matmul %1, %2, %cst {dimension_numbers = #tpu.dot_dimension_numbers<[1], [0], [0], [1], [0, 0, 1, 1], [], []>} : vector<16x16xf32>, vector<16x32xf32>, vector<16x32xf32> -> vector<16x32xf32>
    %c0_4 = arith.constant 0 : index
    %c0_5 = arith.constant 0 : index
    %4 = vector.load %arg3[%c0_4, %c0_5] : memref<1x32xf32, #tpu.memory_space<vmem>>, vector<1x32xf32>
    %5 = vector.broadcast %4 : vector<1x32xf32> to vector<16x32xf32>
    %6 = arith.addf %3, %5 : vector<16x32xf32>
    %cst_6 = arith.constant 0.000000e+00 : f32
    %7 = vector.broadcast %cst_6 : f32 to vector<16x32xf32>
    %8 = arith.maximumf %6, %7 : vector<16x32xf32>
    %9 = vector.shape_cast %8 : vector<16x32xf32> to vector<2x8x32xf32>
    %cst_7 = arith.constant dense<0.000000e+00> : vector<2x32xf32>
    %10 = vector.multi_reduction <add>, %9, %cst_7 [1] : vector<2x8x32xf32> to vector<2x32xf32>
    %c0_8 = arith.constant 0 : index
    %c0_9 = arith.constant 0 : index
    %11 = vector.load %arg4[%c0_8, %c0_9] : memref<32x32xf32, #tpu.memory_space<vmem>>, vector<32x32xf32>
    %cst_10 = arith.constant dense<0.000000e+00> : vector<2x32xf32>
    %12 = tpu.matmul %10, %11, %cst_10 {dimension_numbers = #tpu.dot_dimension_numbers<[1], [0], [0], [1], [0, 0, 1, 1], [], []>} : vector<2x32xf32>, vector<32x32xf32>, vector<2x32xf32> -> vector<2x32xf32>
    %c0_11 = arith.constant 0 : index
    %c0_12 = arith.constant 0 : index
    %13 = vector.load %arg5[%c0_11, %c0_12] : memref<1x32xf32, #tpu.memory_space<vmem>>, vector<1x32xf32>
    %14 = vector.broadcast %13 : vector<1x32xf32> to vector<2x32xf32>
    %15 = arith.addf %12, %14 : vector<2x32xf32>
    %c0_13 = arith.constant 0 : index
    %c0_14 = arith.constant 0 : index
    %16 = vector.load %arg6[%c0_13, %c0_14] : memref<32x32xf32, #tpu.memory_space<vmem>>, vector<32x32xf32>
    %cst_15 = arith.constant dense<0.000000e+00> : vector<2x32xf32>
    %17 = tpu.matmul %15, %16, %cst_15 {dimension_numbers = #tpu.dot_dimension_numbers<[1], [0], [0], [1], [0, 0, 1, 1], [], []>} : vector<2x32xf32>, vector<32x32xf32>, vector<2x32xf32> -> vector<2x32xf32>
    %c0_16 = arith.constant 0 : index
    %c0_17 = arith.constant 0 : index
    %18 = vector.load %arg7[%c0_16, %c0_17] : memref<1x32xf32, #tpu.memory_space<vmem>>, vector<1x32xf32>
    %19 = vector.broadcast %18 : vector<1x32xf32> to vector<2x32xf32>
    %20 = arith.addf %17, %19 : vector<2x32xf32>
    %cst_18 = arith.constant 0.000000e+00 : f32
    %21 = vector.broadcast %cst_18 : f32 to vector<2x32xf32>
    %22 = arith.maximumf %20, %21 : vector<2x32xf32>
    %c0_19 = arith.constant 0 : index
    %c0_20 = arith.constant 0 : index
    %23 = vector.load %arg8[%c0_19, %c0_20] : memref<32x32xf32, #tpu.memory_space<vmem>>, vector<32x32xf32>
    %cst_21 = arith.constant dense<0.000000e+00> : vector<2x32xf32>
    %24 = tpu.matmul %22, %23, %cst_21 {dimension_numbers = #tpu.dot_dimension_numbers<[1], [0], [0], [1], [0, 0, 1, 1], [], []>} : vector<2x32xf32>, vector<32x32xf32>, vector<2x32xf32> -> vector<2x32xf32>
    %c0_22 = arith.constant 0 : index
    %c0_23 = arith.constant 0 : index
    %25 = vector.load %arg9[%c0_22, %c0_23] : memref<1x32xf32, #tpu.memory_space<vmem>>, vector<1x32xf32>
    %26 = vector.broadcast %25 : vector<1x32xf32> to vector<2x32xf32>
    %27 = arith.addf %24, %26 : vector<2x32xf32>
    %28 = tpu.concatenate %27, %27, %27, %27, %27, %27, %27, %27 in 1 : vector<2x32xf32>, vector<2x32xf32>, vector<2x32xf32>, vector<2x32xf32>, vector<2x32xf32>, vector<2x32xf32>, vector<2x32xf32>, vector<2x32xf32> -> vector<2x256xf32>
    %c0_24 = arith.constant 0 : index
    %c0_25 = arith.constant 0 : index
    %29 = vector.load %arg10[%c0_24, %c0_25] : memref<2x256xf32, #tpu.memory_space<vmem>>, vector<2x256xf32>
    tpu.vector_store %arg10[%c0_24, %c0_25], %28 {strides = array<i32>} : memref<2x256xf32, #tpu.memory_space<vmem>>, vector<2x256xf32>,
    return
  }
  func.func @transform_0(%arg0: i32) -> (i32, i32, i32) {
    %c0_i32 = arith.constant 0 : i32
    %c0_i32_0 = arith.constant 0 : i32
    %c0_i32_1 = arith.constant 0 : i32
    return %arg0, %c0_i32, %c0_i32_0 : i32, i32, i32
  }
  func.func @transform_1(%arg0: i32) -> (i32, i32) {
    %c0_i32 = arith.constant 0 : i32
    %c0_i32_0 = arith.constant 0 : i32
    %c0_i32_1 = arith.constant 0 : i32
    return %c0_i32, %c0_i32_0 : i32, i32
  }
  func.func @transform_2(%arg0: i32) -> (i32, i32) {
    %c0_i32 = arith.constant 0 : i32
    %c0_i32_0 = arith.constant 0 : i32
    %c0_i32_1 = arith.constant 0 : i32
    return %c0_i32, %c0_i32_0 : i32, i32
  }
  func.func @transform_3(%arg0: i32) -> (i32, i32) {
    %c0_i32 = arith.constant 0 : i32
    %c0_i32_0 = arith.constant 0 : i32
    %c0_i32_1 = arith.constant 0 : i32
    return %c0_i32, %c0_i32_0 : i32, i32
  }
  func.func @transform_4(%arg0: i32) -> (i32, i32) {
    %c0_i32 = arith.constant 0 : i32
    %c0_i32_0 = arith.constant 0 : i32
    %c0_i32_1 = arith.constant 0 : i32
    return %c0_i32, %c0_i32_0 : i32, i32
  }
  func.func @transform_5(%arg0: i32) -> (i32, i32) {
    %c0_i32 = arith.constant 0 : i32
    %c0_i32_0 = arith.constant 0 : i32
    %c0_i32_1 = arith.constant 0 : i32
    return %c0_i32, %c0_i32_0 : i32, i32
  }
  func.func @transform_6(%arg0: i32) -> (i32, i32) {
    %c0_i32 = arith.constant 0 : i32
    %c0_i32_0 = arith.constant 0 : i32
    %c0_i32_1 = arith.constant 0 : i32
    return %c0_i32, %c0_i32_0 : i32, i32
  }
  func.func @transform_7(%arg0: i32) -> (i32, i32) {
    %c0_i32 = arith.constant 0 : i32
    %c0_i32_0 = arith.constant 0 : i32
    %c0_i32_1 = arith.constant 0 : i32
    return %c0_i32, %c0_i32_0 : i32, i32
  }
  func.func @transform_8(%arg0: i32) -> (i32, i32) {
    %c0_i32 = arith.constant 0 : i32
    %c0_i32_0 = arith.constant 0 : i32
    %c0_i32_1 = arith.constant 0 : i32
    return %c0_i32, %c0_i32_0 : i32, i32
  }
  func.func @transform_9(%arg0: i32) -> (i32, i32) {
    %c0_i32 = arith.constant 0 : i32
    %c0_i32_0 = arith.constant 0 : i32
    return %arg0, %c0_i32 : i32, i32
  }
}

</mosaic_0001>

<llo_original>
// kernel: tpu_custom_call.1
$region0: #{tpu_custom_call.1}
  #allocation0 [shape = 'u32[]', space=smem, size = 0x4, offset = 0x4, fixed_abs, tag = 'smem constant byte address 0x4 - core index']
  #allocation1 [shape = 'u32[144,128]{1,0:T(1,128)}', space=vmem, size = 0x12000, scoped, tag = 'internal scratch']
  %s0 = inlined_call_operand.hbm [shape: f32[2,8,16], index: 0, kind: input, shape index: {}]
  %s1 = inlined_call_operand.hbm [shape: f32[16,32], index: 1, kind: input, shape index: {}]
  %s2 = inlined_call_operand.vmem [shape: f32[1,32], index: 2, kind: input, shape index: {}]
  %s3 = inlined_call_operand.hbm [shape: f32[32,32], index: 3, kind: input, shape index: {}]
  %s4 = inlined_call_operand.vmem [shape: f32[1,32], index: 4, kind: input, shape index: {}]
  %s5 = inlined_call_operand.hbm [shape: f32[32,32], index: 5, kind: input, shape index: {}]
  %s6 = inlined_call_operand.vmem [shape: f32[1,32], index: 6, kind: input, shape index: {}]
  %s7 = inlined_call_operand.hbm [shape: f32[32,32], index: 7, kind: input, shape index: {}]
  %s8 = inlined_call_operand.vmem [shape: f32[1,32], index: 8, kind: input, shape index: {}]
  %s9 = inlined_call_operand.hbm [shape: f32[2,256], index: 9, kind: output, shape index: {}]
  %s10 = sld [smem:[#allocation0]]
  $region66: #{tpu_custom_call.1} parent=0
    _
  %s12 = ssub.s32 1, %s10
  %s13 = scalar_select 0, %s12, %s10
  $region1: #{tpu_custom_call.1} parent=0
    #allocation2 [shape = 'u8[8192]{0}', space=vmem, size = 0x2000, scoped, tag = 'input window, operand 0, single buffered']
    #allocation3 [shape = 's32[1]{0}', space=sflag, size = 0x4, scoped, tag = 'scoped memory for tpu_custom_call.1']
    #allocation4 [shape = 's32[1]{0}', space=sflag, size = 0x4, scoped, tag = 'scoped memory for tpu_custom_call.1']
    #allocation5 [shape = 'u8[8192]{0}', space=vmem, size = 0x2000, scoped, tag = 'input window, operand 1, single buffered']
    #allocation6 [shape = 's32[1]{0}', space=sflag, size = 0x4, scoped, tag = 'scoped memory for tpu_custom_call.1']
    #allocation7 [shape = 'u8[16384]{0}', space=vmem, size = 0x4000, scoped, tag = 'input window, operand 3, single buffered']
    #allocation8 [shape = 'u8[16384]{0}', space=vmem, size = 0x4000, scoped, tag = 'input window, operand 5, single buffered']
    #allocation9 [shape = 's32[1]{0}', space=sflag, size = 0x4, scoped, tag = 'scoped memory for tpu_custom_call.1']
    #allocation10 [shape = 'u8[16384]{0}', space=vmem, size = 0x4000, scoped, tag = 'input window, operand 7, single buffered']
    #allocation11 [shape = 'u8[2048]{0}', space=vmem, size = 0x800, scoped, tag = 'output window, operand 0, single buffered']
    %14 = vsyncpa [#allocation3], 0
    %15 = vsyncpa [#allocation6], 0
    %16 = vsyncpa [#allocation9], 0
    %17 = vsyncpa [#allocation4], 0
    // Predicated region
    $region2: #{tpu_custom_call.1} parent=1 // pred_check
      _
    $region3: #{tpu_custom_call.1} parent=1 // pred_check_branch
      %19 = sbr.rel (0) target = $region5
    $region4: #{tpu_custom_call.1} parent=1 // pred_region
      %s21 = ssub.s32 256, 256
      %22 = vsyncadd [#allocation3], %s21
      %s23 = sshll.u32 [#allocation2], 4
      %s24 = int_to_ptr.vmem [resolvable:$true] %s23
      %29 = dma.hbm_to_vmem [thread:$0]  %s0, 256, %s24, [#allocation3], 128, 128, 8
    $region5: #{tpu_custom_call.1} parent=1 // pred_fallthru
      _
    // Predicated region
    $region6: #{tpu_custom_call.1} parent=1 // pred_check
      _
    $region7: #{tpu_custom_call.1} parent=1 // pred_check_branch
      %31 = sbr.rel (0) target = $region9
    $region8: #{tpu_custom_call.1} parent=1 // pred_region
      %s33 = ssub.s32 256, 256
      %34 = vsyncadd [#allocation6], %s33
      %s35 = sshll.u32 [#allocation5], 4
      %s36 = int_to_ptr.vmem [resolvable:$true] %s35
      %41 = dma.hbm_to_vmem [thread:$0]  %s1, 256, %s36, [#allocation6], 128, 128, 8
    $region9: #{tpu_custom_call.1} parent=1 // pred_fallthru
      _
    // Predicated region
    $region10: #{tpu_custom_call.1} parent=1 // pred_check
      _
    $region11: #{tpu_custom_call.1} parent=1 // pred_check_branch
      %43 = sbr.rel (0) target = $region13
    $region12: #{tpu_custom_call.1} parent=1 // pred_region
      _
    $region13: #{tpu_custom_call.1} parent=1 // pred_fallthru
      _
    // Predicated region
    $region14: #{tpu_custom_call.1} parent=1 // pred_check
      _
    $region15: #{tpu_custom_call.1} parent=1 // pred_check_branch
      %45 = sbr.rel (0) target = $region17
    $region16: #{tpu_custom_call.1} parent=1 // pred_region
      %s47 = ssub.s32 512, 512
      %48 = vsyncadd [#allocation6], %s47
      %s49 = sshll.u32 [#allocation7], 4
      %s50 = int_to_ptr.vmem [resolvable:$true] %s49
      %55 = dma.hbm_to_vmem [thread:$0]  %s3, 512, %s50, [#allocation6], 128, 128, 8
    $region17: #{tpu_custom_call.1} parent=1 // pred_fallthru
      _
    // Predicated region
    $region18: #{tpu_custom_call.1} parent=1 // pred_check
      _
    $region19: #{tpu_custom_call.1} parent=1 // pred_check_branch
      %57 = sbr.rel (0) target = $region21
    $region20: #{tpu_custom_call.1} parent=1 // pred_region
      _
    $region21: #{tpu_custom_call.1} parent=1 // pred_fallthru
      _
    // Predicated region
    $region22: #{tpu_custom_call.1} parent=1 // pred_check
      _
    $region23: #{tpu_custom_call.1} parent=1 // pred_check_branch
      %59 = sbr.rel (0) target = $region25
    $region24: #{tpu_custom_call.1} parent=1 // pred_region
      %s61 = ssub.s32 512, 512
      %62 = vsyncadd [#allocation9], %s61
      %s63 = sshll.u32 [#allocation8], 4
      %s64 = int_to_ptr.vmem [resolvable:$true] %s63
      %69 = dma.hbm_to_vmem [thread:$0]  %s5, 512, %s64, [#allocation9], 128, 128, 8
    $region25: #{tpu_custom_call.1} parent=1 // pred_fallthru
      _
    // Predicated region
    $region26: #{tpu_custom_call.1} parent=1 // pred_check
      _
    $region27: #{tpu_custom_call.1} parent=1 // pred_check_branch
      %71 = sbr.rel (0) target = $region29
    $region28: #{tpu_custom_call.1} parent=1 // pred_region
      _
    $region29: #{tpu_custom_call.1} parent=1 // pred_fallthru
      _
    // Predicated region
    $region30: #{tpu_custom_call.1} parent=1 // pred_check
      _
    $region31: #{tpu_custom_call.1} parent=1 // pred_check_branch
      %73 = sbr.rel (0) target = $region33
    $region32: #{tpu_custom_call.1} parent=1 // pred_region
      %s75 = ssub.s32 512, 512
      %76 = vsyncadd [#allocation9], %s75
      %s77 = sshll.u32 [#allocation10], 4
      %s78 = int_to_ptr.vmem [resolvable:$true] %s77
      %83 = dma.hbm_to_vmem [thread:$0]  %s7, 512, %s78, [#allocation9], 128, 128, 8
    $region33: #{tpu_custom_call.1} parent=1 // pred_fallthru
      _
    // Predicated region
    $region34: #{tpu_custom_call.1} parent=1 // pred_check
      _
    $region35: #{tpu_custom_call.1} parent=1 // pred_check_branch
      %85 = sbr.rel (0) target = $region37
    $region36: #{tpu_custom_call.1} parent=1 // pred_region
      _
    $region37: #{tpu_custom_call.1} parent=1 // pred_fallthru
      _
    // Predicated region
    $region38: #{tpu_custom_call.1} parent=1 // pred_check
      _
    $region39: #{tpu_custom_call.1} parent=1 // pred_check_branch
      %87 = sbr.rel (0) target = $region41
    $region40: #{tpu_custom_call.1} parent=1 // pred_region
      %88 = dma.done [#allocation3], 256
    $region41: #{tpu_custom_call.1} parent=1 // pred_fallthru
      _
    // Predicated region
    $region42: #{tpu_custom_call.1} parent=1 // pred_check
      _
    $region43: #{tpu_custom_call.1} parent=1 // pred_check_branch
      %90 = sbr.rel (0) target = $region45
    $region44: #{tpu_custom_call.1} parent=1 // pred_region
      %91 = dma.done [#allocation6], 256
    $region45: #{tpu_custom_call.1} parent=1 // pred_fallthru
      _
    // Predicated region
    $region46: #{tpu_custom_call.1} parent=1 // pred_check
      _
    $region47: #{tpu_custom_call.1} parent=1 // pred_check_branch
      %93 = sbr.rel (0) target = $region49
    $region48: #{tpu_custom_call.1} parent=1 // pred_region
      %94 = dma.done [#allocation6], 512
    $region49: #{tpu_custom_call.1} parent=1 // pred_fallthru
      _
    // Predicated region
    $region50: #{tpu_custom_call.1} parent=1 // pred_check
      _
    $region51: #{tpu_custom_call.1} parent=1 // pred_check_branch
      %96 = sbr.rel (0) target = $region53
    $region52: #{tpu_custom_call.1} parent=1 // pred_region
      %97 = dma.done [#allocation9], 512
    $region53: #{tpu_custom_call.1} parent=1 // pred_fallthru
      _
    // Predicated region
    $region54: #{tpu_custom_call.1} parent=1 // pred_check
      _
    $region55: #{tpu_custom_call.1} parent=1 // pred_check_branch
      %99 = sbr.rel (0) target = $region57
    $region56: #{tpu_custom_call.1} parent=1 // pred_region
      %100 = dma.done [#allocation9], 512
    $region57: #{tpu_custom_call.1} parent=1 // pred_fallthru
      _
    %v101 = vld [vmem:[#allocation2] sm:$0xff]
    %v102 = vld [vmem:[#allocation2 + $0x8] sm:$0xff]
    %v103 = vld [vmem:[#allocation5] sm:$0xff]
    %v104 = vld [vmem:[#allocation5 + $0x8] sm:$0xff]
    %v105 = vld [vmem:[%s2] sm:$0x1]
    %v107 = vlaneseq
    %v108 = vshrl.u32 %v107, 7
    %v109 = vsub.s32 0, %v108
    %v110 = vrot.slane %v105, %v109
    %vm112 = vcmask 130048
    %v114 = vsel %vm112, %v101, 0
    %v117 = vsel %vm112, %v102, 0
    %119 = vmatprep.subr.mxu0 0.0
    %120 = vmatpush1.msra.mxu0 %v103
    %121 = vmatprep.subr.mxu0 0.0
    %122 = vmatpush1.msra.mxu0 %v104
    %123 = vmatprep.subr.mxu0 0.0
    %124 = vmatpush1.msra.mxu0 0.0
    %125 = vmatprep.subr.mxu0 0.0
    %126 = vmatpush1.msra.mxu0 0.0
    %127 = vmatprep.subr.mxu0 0.0
    %128 = vmatpush1.msra.mxu0 0.0
    %129 = vmatprep.subr.mxu0 0.0
    %130 = vmatpush1.msra.mxu0 0.0
    %131 = vmatprep.subr.mxu0 0.0
    %132 = vmatpush1.msra.mxu0 0.0
    %133 = vmatprep.subr.mxu0 0.0
    %134 = vmatpush1.msra.mxu0 0.0
    %135 = vmatprep.subr.mxu0 0.0
    %136 = vmatpush1.msra.mxu0 0.0
    %137 = vmatprep.subr.mxu0 0.0
    %138 = vmatpush1.msra.mxu0 0.0
    %139 = vmatprep.subr.mxu0 0.0
    %140 = vmatpush1.msra.mxu0 0.0
    %141 = vmatprep.subr.mxu0 0.0
    %142 = vmatpush1.msra.mxu0 0.0
    %143 = vmatprep.subr.mxu0 0.0
    %144 = vmatpush1.msra.mxu0 0.0
    %145 = vmatprep.subr.mxu0 0.0
    %146 = vmatpush1.msra.mxu0 0.0
    %147 = vmatprep.subr.mxu0 0.0
    %148 = vmatpush1.msra.mxu0 0.0
    %149 = vmatprep.subr.mxu0 0.0
    %150 = vmatpush1.msra.mxu0 0.0
    %151 = vmatprep.subr.mxu0 0.0
    %152 = vmatpush1.msra.mxu0 0.0
    %153 = vmatprep.subr.mxu0 0.0
    %154 = vmatpush1.msra.mxu0 0.0
    %155 = vmatprep.subr.mxu0 0.0
    %156 = vmatpush1.msra.mxu0 0.0
    %157 = vmatprep.subr.mxu0 0.0
    %158 = vmatpush1.msra.mxu0 0.0
    %159 = vmatprep.subr.mxu0 0.0
    %160 = vmatpush1.msra.mxu0 0.0
    %161 = vmatprep.subr.mxu0 0.0
    %162 = vmatpush1.msra.mxu0 0.0
    %163 = vmatprep.subr.mxu0 0.0
    %164 = vmatpush1.msra.mxu0 0.0
    %165 = vmatprep.subr.mxu0 0.0
    %166 = vmatpush1.msra.mxu0 0.0
    %167 = vmatprep.subr.mxu0 0.0
    %168 = vmatpush1.msra.mxu0 0.0
    %169 = vmatprep.subr.mxu0 0.0
    %170 = vmatpush1.msra.mxu0 0.0
    %171 = vmatprep.subr.mxu0 0.0
    %172 = vmatpush1.msra.mxu0 0.0
    %173 = vmatprep.subr.mxu0 0.0
    %174 = vmatpush1.msra.mxu0 0.0
    %175 = vmatprep.subr.mxu0 0.0
    %176 = vmatpush1.msra.mxu0 0.0
    %177 = vmatprep.subr.mxu0 0.0
    %178 = vmatpush1.msra.mxu0 0.0
    %179 = vmatprep.subr.mxu0 0.0
    %180 = vmatpush1.msra.mxu0 0.0
    %181 = vmatprep.subr.mxu0 0.0
    %182 = vmatpush1.msra.mxu0 0.0
    %183 = vmatprep.mubr.f32.mxu0 0.0
    %184 = vmatmul.mubr.f32.gmra.mrb[0].mxu0 %v114
    %v185 = vpop.f32.mrb[0].mxu0
    %v186 = vadd.f32 %v110, %v185
    %v187 = vpop.f32.mrb[0].mxu0
    %188 = vmatprep.mubr.f32.mxu0 0.0
    %189 = vmatmul.mubr.f32.gmra.mrb[0].mxu0 %v117
    %v190 = vpop.f32.mrb[0].mxu0
    %v191 = vadd.f32 %v110, %v190
    %v192 = vpop.f32.mrb[0].mxu0
    %193 = vdwg.mxu0
    %v194 = vmax.f32 %v186, 0.0
    %v195 = vmax.f32 %v191, 0.0
    %vm196 = vcmask 261120
    %v197 = vsel %vm196, %v194, 0.0
    %v198 = vrot.slane %v197, 4
    %v199 = vadd.f32 %v197, %v198
    %v200 = vrot.slane %v199, 2
    %v201 = vadd.f32 %v199, %v200
    %v202 = vrot.slane %v201, 1
    %v203 = vadd.f32 %v201, %v202
    %v204 = vsel %vm196, %v195, 0.0
    %v205 = vrot.slane %v204, 4
    %v206 = vadd.f32 %v204, %v205
    %v207 = vrot.slane %v206, 2
    %v208 = vadd.f32 %v206, %v207
    %v209 = vrot.slane %v208, 1
    %v210 = vadd.f32 %v208, %v209
    %v211 = vld [vmem:[#allocation7] sm:$0xff]
    %v212 = vld [vmem:[#allocation7 + $0x8] sm:$0xff]
    %v213 = vld [vmem:[#allocation7 + $0x10] sm:$0xff]
    %v214 = vld [vmem:[#allocation7 + $0x18] sm:$0xff]
    %v215 = vld [vmem:[%s4] sm:$0x1]
    %v217 = vlaneseq
    %v218 = vshrl.u32 %v217, 7
    %v219 = vsub.s32 0, %v218
    %v220 = vrot.slane %v215, %v219
    %vm224 = vcmask 1041409
    %v225 = vsel %vm224, %v210, %v203
    %v226 = vsel %vm196, %v225, 0
    %228 = vmatprep.subr.mxu0 0.0
    %229 = vmatpush1.msra.mxu0 %v211
    %230 = vmatprep.subr.mxu0 0.0
    %231 = vmatpush1.msra.mxu0 %v212
    %232 = vmatprep.subr.mxu0 0.0
    %233 = vmatpush1.msra.mxu0 %v213
    %234 = vmatprep.subr.mxu0 0.0
    %235 = vmatpush1.msra.mxu0 %v214
    %236 = vmatprep.subr.mxu0 0.0
    %237 = vmatpush1.msra.mxu0 0.0
    %238 = vmatprep.subr.mxu0 0.0
    %239 = vmatpush1.msra.mxu0 0.0
    %240 = vmatprep.subr.mxu0 0.0
    %241 = vmatpush1.msra.mxu0 0.0
    %242 = vmatprep.subr.mxu0 0.0
    %243 = vmatpush1.msra.mxu0 0.0
    %244 = vmatprep.subr.mxu0 0.0
    %245 = vmatpush1.msra.mxu0 0.0
    %246 = vmatprep.subr.mxu0 0.0
    %247 = vmatpush1.msra.mxu0 0.0
    %248 = vmatprep.subr.mxu0 0.0
    %249 = vmatpush1.msra.mxu0 0.0
    %250 = vmatprep.subr.mxu0 0.0
    %251 = vmatpush1.msra.mxu0 0.0
    %252 = vmatprep.subr.mxu0 0.0
    %253 = vmatpush1.msra.mxu0 0.0
    %254 = vmatprep.subr.mxu0 0.0
    %255 = vmatpush1.msra.mxu0 0.0
    %256 = vmatprep.subr.mxu0 0.0
    %257 = vmatpush1.msra.mxu0 0.0
    %258 = vmatprep.subr.mxu0 0.0
    %259 = vmatpush1.msra.mxu0 0.0
    %260 = vmatprep.subr.mxu0 0.0
    %261 = vmatpush1.msra.mxu0 0.0
    %262 = vmatprep.subr.mxu0 0.0
    %263 = vmatpush1.msra.mxu0 0.0
    %264 = vmatprep.subr.mxu0 0.0
    %265 = vmatpush1.msra.mxu0 0.0
    %266 = vmatprep.subr.mxu0 0.0
    %267 = vmatpush1.msra.mxu0 0.0
    %268 = vmatprep.subr.mxu0 0.0
    %269 = vmatpush1.msra.mxu0 0.0
    %270 = vmatprep.subr.mxu0 0.0
    %271 = vmatpush1.msra.mxu0 0.0
    %272 = vmatprep.subr.mxu0 0.0
    %273 = vmatpush1.msra.mxu0 0.0
    %274 = vmatprep.subr.mxu0 0.0
    %275 = vmatpush1.msra.mxu0 0.0
    %276 = vmatprep.subr.mxu0 0.0
    %277 = vmatpush1.msra.mxu0 0.0
    %278 = vmatprep.subr.mxu0 0.0
    %279 = vmatpush1.msra.mxu0 0.0
    %280 = vmatprep.subr.mxu0 0.0
    %281 = vmatpush1.msra.mxu0 0.0
    %282 = vmatprep.subr.mxu0 0.0
    %283 = vmatpush1.msra.mxu0 0.0
    %284 = vmatprep.subr.mxu0 0.0
    %285 = vmatpush1.msra.mxu0 0.0
    %286 = vmatprep.subr.mxu0 0.0
    %287 = vmatpush1.msra.mxu0 0.0
    %288 = vmatprep.subr.mxu0 0.0
    %289 = vmatpush1.msra.mxu0 0.0
    %290 = vmatprep.subr.mxu0 0.0
    %291 = vmatpush1.msra.mxu0 0.0
    %292 = vmatprep.mubr.f32.mxu0 0.0
    %293 = vmatmul.mubr.f32.gmra.mrb[0].mxu0 %v226
    %v294 = vpop.f32.mrb[0].mxu0
    %v295 = vadd.f32 %v220, %v294
    %v296 = vpop.f32.mrb[0].mxu0
    %297 = vdwg.mxu0
    %v298 = vld [vmem:[#allocation8] sm:$0xff]
    %v299 = vld [vmem:[#allocation8 + $0x8] sm:$0xff]
    %v300 = vld [vmem:[#allocation8 + $0x10] sm:$0xff]
    %v301 = vld [vmem:[#allocation8 + $0x18] sm:$0xff]
    %v302 = vld [vmem:[%s6] sm:$0x1]
    %v304 = vlaneseq
    %v305 = vshrl.u32 %v304, 7
    %v306 = vsub.s32 0, %v305
    %v307 = vrot.slane %v302, %v306
    %v310 = vsel %vm196, %v295, 0
    %312 = vmatprep.subr.mxu0 0.0
    %313 = vmatpush1.msra.mxu0 %v298
    %314 = vmatprep.subr.mxu0 0.0
    %315 = vmatpush1.msra.mxu0 %v299
    %316 = vmatprep.subr.mxu0 0.0
    %317 = vmatpush1.msra.mxu0 %v300
    %318 = vmatprep.subr.mxu0 0.0
    %319 = vmatpush1.msra.mxu0 %v301
    %320 = vmatprep.subr.mxu0 0.0
    %321 = vmatpush1.msra.mxu0 0.0
    %322 = vmatprep.subr.mxu0 0.0
    %323 = vmatpush1.msra.mxu0 0.0
    %324 = vmatprep.subr.mxu0 0.0
    %325 = vmatpush1.msra.mxu0 0.0
    %326 = vmatprep.subr.mxu0 0.0
    %327 = vmatpush1.msra.mxu0 0.0
    %328 = vmatprep.subr.mxu0 0.0
    %329 = vmatpush1.msra.mxu0 0.0
    %330 = vmatprep.subr.mxu0 0.0
    %331 = vmatpush1.msra.mxu0 0.0
    %332 = vmatprep.subr.mxu0 0.0
    %333 = vmatpush1.msra.mxu0 0.0
    %334 = vmatprep.subr.mxu0 0.0
    %335 = vmatpush1.msra.mxu0 0.0
    %336 = vmatprep.subr.mxu0 0.0
    %337 = vmatpush1.msra.mxu0 0.0
    %338 = vmatprep.subr.mxu0 0.0
    %339 = vmatpush1.msra.mxu0 0.0
    %340 = vmatprep.subr.mxu0 0.0
    %341 = vmatpush1.msra.mxu0 0.0
    %342 = vmatprep.subr.mxu0 0.0
    %343 = vmatpush1.msra.mxu0 0.0
    %344 = vmatprep.subr.mxu0 0.0
    %345 = vmatpush1.msra.mxu0 0.0
    %346 = vmatprep.subr.mxu0 0.0
    %347 = vmatpush1.msra.mxu0 0.0
    %348 = vmatprep.subr.mxu0 0.0
    %349 = vmatpush1.msra.mxu0 0.0
    %350 = vmatprep.subr.mxu0 0.0
    %351 = vmatpush1.msra.mxu0 0.0
    %352 = vmatprep.subr.mxu0 0.0
    %353 = vmatpush1.msra.mxu0 0.0
    %354 = vmatprep.subr.mxu0 0.0
    %355 = vmatpush1.msra.mxu0 0.0
    %356 = vmatprep.subr.mxu0 0.0
    %357 = vmatpush1.msra.mxu0 0.0
    %358 = vmatprep.subr.mxu0 0.0
    %359 = vmatpush1.msra.mxu0 0.0
    %360 = vmatprep.subr.mxu0 0.0
    %361 = vmatpush1.msra.mxu0 0.0
    %362 = vmatprep.subr.mxu0 0.0
    %363 = vmatpush1.msra.mxu0 0.0
    %364 = vmatprep.subr.mxu0 0.0
    %365 = vmatpush1.msra.mxu0 0.0
    %366 = vmatprep.subr.mxu0 0.0
    %367 = vmatpush1.msra.mxu0 0.0
    %368 = vmatprep.subr.mxu0 0.0
    %369 = vmatpush1.msra.mxu0 0.0
    %370 = vmatprep.subr.mxu0 0.0
    %371 = vmatpush1.msra.mxu0 0.0
    %372 = vmatprep.subr.mxu0 0.0
    %373 = vmatpush1.msra.mxu0 0.0
    %374 = vmatprep.subr.mxu0 0.0
    %375 = vmatpush1.msra.mxu0 0.0
    %376 = vmatprep.mubr.f32.mxu0 0.0
    %377 = vmatmul.mubr.f32.gmra.mrb[0].mxu0 %v310
    %v378 = vpop.f32.mrb[0].mxu0
    %v379 = vadd.f32 %v307, %v378
    %v380 = vpop.f32.mrb[0].mxu0
    %381 = vdwg.mxu0
    %v382 = vmax.f32 %v379, 0.0
    %v383 = vld [vmem:[#allocation10] sm:$0xff]
    %v384 = vld [vmem:[#allocation10 + $0x8] sm:$0xff]
    %v385 = vld [vmem:[#allocation10 + $0x10] sm:$0xff]
    %v386 = vld [vmem:[#allocation10 + $0x18] sm:$0xff]
    %v387 = vld [vmem:[%s8] sm:$0x1]
    %v389 = vlaneseq
    %v390 = vshrl.u32 %v389, 7
    %v391 = vsub.s32 0, %v390
    %v392 = vrot.slane %v387, %v391
    %v395 = vsel %vm196, %v382, 0
    %397 = vmatprep.subr.mxu0 0.0
    %398 = vmatpush1.msra.mxu0 %v383
    %399 = vmatprep.subr.mxu0 0.0
    %400 = vmatpush1.msra.mxu0 %v384
    %401 = vmatprep.subr.mxu0 0.0
    %402 = vmatpush1.msra.mxu0 %v385
    %403 = vmatprep.subr.mxu0 0.0
    %404 = vmatpush1.msra.mxu0 %v386
    %405 = vmatprep.subr.mxu0 0.0
    %406 = vmatpush1.msra.mxu0 0.0
    %407 = vmatprep.subr.mxu0 0.0
    %408 = vmatpush1.msra.mxu0 0.0
    %409 = vmatprep.subr.mxu0 0.0
    %410 = vmatpush1.msra.mxu0 0.0
    %411 = vmatprep.subr.mxu0 0.0
    %412 = vmatpush1.msra.mxu0 0.0
    %413 = vmatprep.subr.mxu0 0.0
    %414 = vmatpush1.msra.mxu0 0.0
    %415 = vmatprep.subr.mxu0 0.0
    %416 = vmatpush1.msra.mxu0 0.0
    %417 = vmatprep.subr.mxu0 0.0
    %418 = vmatpush1.msra.mxu0 0.0
    %419 = vmatprep.subr.mxu0 0.0
    %420 = vmatpush1.msra.mxu0 0.0
    %421 = vmatprep.subr.mxu0 0.0
    %422 = vmatpush1.msra.mxu0 0.0
    %423 = vmatprep.subr.mxu0 0.0
    %424 = vmatpush1.msra.mxu0 0.0
    %425 = vmatprep.subr.mxu0 0.0
    %426 = vmatpush1.msra.mxu0 0.0
    %427 = vmatprep.subr.mxu0 0.0
    %428 = vmatpush1.msra.mxu0 0.0
    %429 = vmatprep.subr.mxu0 0.0
    %430 = vmatpush1.msra.mxu0 0.0
    %431 = vmatprep.subr.mxu0 0.0
    %432 = vmatpush1.msra.mxu0 0.0
    %433 = vmatprep.subr.mxu0 0.0
    %434 = vmatpush1.msra.mxu0 0.0
    %435 = vmatprep.subr.mxu0 0.0
    %436 = vmatpush1.msra.mxu0 0.0
    %437 = vmatprep.subr.mxu0 0.0
    %438 = vmatpush1.msra.mxu0 0.0
    %439 = vmatprep.subr.mxu0 0.0
    %440 = vmatpush1.msra.mxu0 0.0
    %441 = vmatprep.subr.mxu0 0.0
    %442 = vmatpush1.msra.mxu0 0.0
    %443 = vmatprep.subr.mxu0 0.0
    %444 = vmatpush1.msra.mxu0 0.0
    %445 = vmatprep.subr.mxu0 0.0
    %446 = vmatpush1.msra.mxu0 0.0
    %447 = vmatprep.subr.mxu0 0.0
    %448 = vmatpush1.msra.mxu0 0.0
    %449 = vmatprep.subr.mxu0 0.0
    %450 = vmatpush1.msra.mxu0 0.0
    %451 = vmatprep.subr.mxu0 0.0
    %452 = vmatpush1.msra.mxu0 0.0
    %453 = vmatprep.subr.mxu0 0.0
    %454 = vmatpush1.msra.mxu0 0.0
    %455 = vmatprep.subr.mxu0 0.0
    %456 = vmatpush1.msra.mxu0 0.0
    %457 = vmatprep.subr.mxu0 0.0
    %458 = vmatpush1.msra.mxu0 0.0
    %459 = vmatprep.subr.mxu0 0.0
    %460 = vmatpush1.msra.mxu0 0.0
    %461 = vmatprep.mubr.f32.mxu0 0.0
    %462 = vmatmul.mubr.f32.gmra.mrb[0].mxu0 %v395
    %v463 = vpop.f32.mrb[0].mxu0
    %v464 = vadd.f32 %v392, %v463
    %v465 = vpop.f32.mrb[0].mxu0
    %466 = vdwg.mxu0
    %468 = vrot.lane.b32.xlu0 %v464, 32
    %v469 = vpop.permute.xlu0 %468
    %471 = vrot.lane.b32.xlu0 %v464, 64
    %v472 = vpop.permute.xlu0 %471
    %474 = vrot.lane.b32.xlu0 %v464, 96
    %v475 = vpop.permute.xlu0 %474
    %v477 = vsel %vm196, %v464, %v469
    %vm478 = vcmask 523264
    %v479 = vsel %vm478, %v477, %v472
    %vm480 = vcmask 785408
    %v481 = vsel %vm480, %v479, %v475
    %v483 = vcombine.low %v481, %v481
    %v485 = vunpack.c.l.s4 1983009808
    %v486 = vunpack.c.0.s8 %v485
    %v487 = vlaneseq
    %v488 = vshrl.u32 %v487, 7
    %v489 = vsub.s32 %v486, %v488
    %v490 = vrot.slane %v483, %v489
    %492 = vst [vmem:[#allocation11] sm:$0xf] %v490
    // Predicated region
    $region58: #{tpu_custom_call.1} parent=1 // pred_check
      _
    $region59: #{tpu_custom_call.1} parent=1 // pred_check_branch
      %494 = sbr.rel (0) target = $region61
    $region60: #{tpu_custom_call.1} parent=1 // pred_region
      %s496 = ssub.s32 64, 64
      %497 = vsyncadd [#allocation4], %s496
      %s499 = sshll.u32 [#allocation11], 4
      %s500 = int_to_ptr.vmem [resolvable:$true] %s499
      %502 = dma.vmem_to_hbm [thread:$0]  %s500, 64, %s9, [#allocation4]
    $region61: #{tpu_custom_call.1} parent=1 // pred_fallthru
      _
    // Predicated region
    $region62: #{tpu_custom_call.1} parent=1 // pred_check
      _
    $region63: #{tpu_custom_call.1} parent=1 // pred_check_branch
      %504 = sbr.rel (0) target = $region65
    $region64: #{tpu_custom_call.1} parent=1 // pred_region
      %505 = dma.done [#allocation4], 64
    $region65: #{tpu_custom_call.1} parent=1 // pred_fallthru
      _
    %506 = vsyncpa [#allocation3], 1
    %507 = vsyncpa [#allocation6], 1
    %508 = vsyncpa [#allocation9], 1
    %509 = vsyncpa [#allocation4], 1

</llo_original>
